<compile_context>
chip_gen: v6e
topology: v6e:2x2x1
jax: 0.10.0
libtpu: 0.0.40
codegen_flags: <defaults>
</compile_context>

<pallas_src>
import functools

import jax
import jax.numpy as jnp
from jax.experimental import pallas as pl
from jax.experimental.pallas import tpu as pltpu


def autoencoder_kernel(x_ref, wgt_ref, bg_ref, wht_ref, bh_ref, out_ref):
    """One batch-tile of the autoencoder forward pass.

    x_ref:   (TB, NQ)    input user vectors (f32, cast to bf16 in-kernel)
    wgt_ref: (NQ, Kp)    encoder weight, pre-transposed + K zero-padded (bf16)
    bg_ref:  (1,  Kp)    encoder bias, K zero-padded (f32)
    wht_ref: (Kp, NQ)    decoder weight, pre-transposed + K zero-padded (bf16)
    bh_ref:  (1,  NQ)    decoder bias (f32)
    out_ref: (TB, NQ)    output user vectors
    """
    x = x_ref[...].astype(jnp.bfloat16)  # in-kernel cast: free VPU op, no extra HBM pass
    # Encoder: sigmoid(x @ Wg^T + bg)  -- canonical (M,C)@(C,N) on the MXU
    h1 = jnp.dot(x, wgt_ref[...], preferred_element_type=jnp.float32) + bg_ref[...]
    h1 = jax.nn.sigmoid(h1)
    # Decoder: sigmoid(h1 @ Wh^T + bh)
    h2 = jnp.dot(h1.astype(jnp.bfloat16), wht_ref[...],
                 preferred_element_type=jnp.float32) + bh_ref[...]
    out_ref[...] = jax.nn.sigmoid(h2).astype(out_ref.dtype)


def _round_up(x, m):
    return ((x + m - 1) // m) * m


def _choose_tb(batch, tb):
    """Batch tile: full batch when it fits in one tile, else an 8-aligned tile."""
    if batch <= tb:
        return batch          # single grid step; full-extent batch block is legal
    return max(8, (tb // 8) * 8)


def _vmem_estimate_bytes(tb, nq, kpad):
    x_tile = tb * nq * 4                      # f32 input tile
    o_tile = tb * nq * 4                      # f32 output tile
    weights = 2 * kpad * nq * 2 + (kpad + nq) * 4
    inter = tb * nq * 2 + tb * kpad * 4 + tb * nq * 4  # bf16 x cast + f32 h1 + f32 h2
    return 2 * (x_tile + o_tile) + 2 * weights + inter  # streamed tiles double-buffered


@functools.partial(jax.jit, static_argnames=("tb",))
def autoencoder_forward(x, wg, bg, wh, bh, *, tb=1024):
    """Pallas-backed forward pass.

    x:  (B, NQ) float32 user vectors
    wg: (K, NQ), bg: (K,) or (1, K)   -- nn.Linear(num_question, k)
    wh: (NQ, K), bh: (NQ,) or (1, NQ) -- nn.Linear(k, num_question)
    """
    B, NQ = x.shape
    K = wg.shape[0]
    out_dtype = x.dtype

    tb_eff = _choose_tb(B, tb)
    grid = (pl.cdiv(B, tb_eff),)  # non-divisible last block handled by Pallas (no jnp.pad)

    # Pre-transpose once in the wrapper; zero-pad K -> multiple of 128 for dense lanes.
    Kp = _round_up(K, 128)
    wgt = jnp.zeros((NQ, Kp), jnp.bfloat16).at[:, :K].set(wg.T.astype(jnp.bfloat16))
    wht = jnp.zeros((Kp, NQ), jnp.bfloat16).at[:K, :].set(wh.T.astype(jnp.bfloat16))
    bg_in = jnp.zeros((1, Kp), jnp.float32).at[:, :K].set(bg.reshape(1, K).astype(jnp.float32))
    bh_in = bh.reshape(1, NQ).astype(jnp.float32)

    # Only raise the scoped VMEM limit when a large tb/NQ config needs it; cap at
    # 32 MiB so there is headroom even on v7x (64 MiB physical per TC).
    needed = _vmem_estimate_bytes(tb_eff, NQ, Kp)
    vmem_limit = None
    if needed > (16 << 20):
        vmem_limit = min(needed + (4 << 20), 32 << 20)

    out = pl.pallas_call(
        autoencoder_kernel,
        out_shape=jax.ShapeDtypeStruct((B, NQ), out_dtype),
        grid_spec=pltpu.PrefetchScalarGridSpec(
            num_scalar_prefetch=0,
            grid=grid,
            in_specs=[
                pl.BlockSpec((tb_eff, NQ), lambda i: (i, 0)),  # x tile over batch
                pl.BlockSpec((NQ, Kp), lambda i: (0, 0)),      # WgT (resident)
                pl.BlockSpec((1, Kp), lambda i: (0, 0)),       # bg
                pl.BlockSpec((Kp, NQ), lambda i: (0, 0)),      # WhT (resident)
                pl.BlockSpec((1, NQ), lambda i: (0, 0)),       # bh
            ],
            out_specs=pl.BlockSpec((tb_eff, NQ), lambda i: (i, 0)),
        ),
        compiler_params=pltpu.CompilerParams(
            dimension_semantics=("parallel",),
            vmem_limit_bytes=vmem_limit,
        ),
    )(x, wgt, bg_in, wht, bh_in)

    return out


def reference_forward(x, wg, bg, wh, bh):
    h1 = jax.nn.sigmoid(x @ wg.T + bg)
    return jax.nn.sigmoid(h1 @ wh.T + bh)


if __name__ == "__main__":
    # Small shapes consistent with the module: num_question features, k hidden units.
    batch = 12            # deliberately ragged batch
    num_question = 256
    k = 100               # module default k

    key = jax.random.PRNGKey(0)
    kx, kwg, kbg, kwh, kbh = jax.random.split(key, 5)

    # Parameter init mimicking nn.Linear's U(-1/sqrt(fan_in), 1/sqrt(fan_in)).
    bound_g = 1.0 / jnp.sqrt(num_question)
    bound_h = 1.0 / jnp.sqrt(k)
    wg = jax.random.uniform(kwg, (k, num_question), jnp.float32, -bound_g, bound_g)
    bg = jax.random.uniform(kbg, (k,), jnp.float32, -bound_g, bound_g)
    wh = jax.random.uniform(kwh, (num_question, k), jnp.float32, -bound_h, bound_h)
    bh = jax.random.uniform(kbh, (num_question,), jnp.float32, -bound_h, bound_h)

    x = jax.random.uniform(kx, (batch, num_question), jnp.float32)  # user vectors

    ref = reference_forward(x, wg, bg, wh, bh)

    # Single-tile path (default tb: whole batch in one grid step).
    out = jax.block_until_ready(autoencoder_forward(x, wg, bg, wh, bh))
    assert out.shape == (batch, num_question)
    # bf16 matmul inputs (f32 accumulation): loosened tolerance vs the f32 reference.
    assert jnp.max(jnp.abs(out - ref)) < 2e-2, "mismatch vs reference (single tile)"

    # Multi-step path with a partial last block (exercises the no-pad ragged grid).
    out2 = jax.block_until_ready(autoencoder_forward(x, wg, bg, wh, bh, tb=8))
    assert jnp.max(jnp.abs(out2 - ref)) < 2e-2, "mismatch vs reference (partial block)"

    print("KERNEL_OK")
</pallas_src>

<mosaic_0001>
module attributes {stable_mosaic.version = 11 : i64} {
  func.func @autoencoder_kernel(%arg0: i32, %arg1: memref<12x256xf32, #tpu.memory_space<vmem>>, %arg2: memref<256x128xbf16, #tpu.memory_space<vmem>>, %arg3: memref<1x128xf32, #tpu.memory_space<vmem>>, %arg4: memref<128x256xbf16, #tpu.memory_space<vmem>>, %arg5: memref<1x256xf32, #tpu.memory_space<vmem>>, %arg6: memref<12x256xf32, #tpu.memory_space<vmem>>) attributes {dimension_semantics = [#tpu.dimension_semantics<parallel>], iteration_bounds = array<i64: 1>, scalar_prefetch = 0 : i64, scratch_operands = 0 : i64, tpu.core_type = #tpu.core_type<tc>, window_params = [{transform_indices = @transform_0, window_bounds = array<i64: 12, 256>}, {pipeline_mode = #tpu.pipeline_mode<synchronous>, transform_indices = @transform_1, window_bounds = array<i64: 256, 128>}, {pipeline_mode = #tpu.pipeline_mode<synchronous>, transform_indices = @transform_2, window_bounds = array<i64: 1, 128>}, {pipeline_mode = #tpu.pipeline_mode<synchronous>, transform_indices = @transform_3, window_bounds = array<i64: 128, 256>}, {pipeline_mode = #tpu.pipeline_mode<synchronous>, transform_indices = @transform_4, window_bounds = array<i64: 1, 256>}, {transform_indices = @transform_5, window_bounds = array<i64: 12, 256>}]} {
    %c0 = arith.constant 0 : index
    %c0_0 = arith.constant 0 : index
    %0 = vector.load %arg1[%c0, %c0_0] : memref<12x256xf32, #tpu.memory_space<vmem>>, vector<12x256xf32>
    %1 = arith.truncf %0 : vector<12x256xf32> to vector<12x256xbf16>
    %c0_1 = arith.constant 0 : index
    %c0_2 = arith.constant 0 : index
    %2 = vector.load %arg2[%c0_1, %c0_2] : memref<256x128xbf16, #tpu.memory_space<vmem>>, vector<256x128xbf16>
    %cst = arith.constant dense<0.000000e+00> : vector<12x128xf32>
    %3 = tpu.matmul %1, %2, %cst {dimension_numbers = #tpu.dot_dimension_numbers<[1], [0], [0], [1], [0, 0, 1, 1], [], []>} : vector<12x256xbf16>, vector<256x128xbf16>, vector<12x128xf32> -> vector<12x128xf32>
    %c0_3 = arith.constant 0 : index
    %c0_4 = arith.constant 0 : index
    %4 = vector.load %arg3[%c0_3, %c0_4] : memref<1x128xf32, #tpu.memory_space<vmem>>, vector<1x128xf32>
    %5 = vector.broadcast %4 : vector<1x128xf32> to vector<12x128xf32>
    %6 = arith.addf %3, %5 : vector<12x128xf32>
    %7 = arith.negf %6 : vector<12x128xf32>
    %8 = math.exp %7 : vector<12x128xf32>
    %cst_5 = arith.constant 1.000000e+00 : f32
    %9 = vector.broadcast %cst_5 : f32 to vector<12x128xf32>
    %10 = arith.addf %9, %8 : vector<12x128xf32>
    %11 = arith.divf %9, %10 : vector<12x128xf32>
    %12 = arith.truncf %11 : vector<12x128xf32> to vector<12x128xbf16>
    %c0_6 = arith.constant 0 : index
    %c0_7 = arith.constant 0 : index
    %13 = vector.load %arg4[%c0_6, %c0_7] : memref<128x256xbf16, #tpu.memory_space<vmem>>, vector<128x256xbf16>
    %cst_8 = arith.constant dense<0.000000e+00> : vector<12x256xf32>
    %14 = tpu.matmul %12, %13, %cst_8 {dimension_numbers = #tpu.dot_dimension_numbers<[1], [0], [0], [1], [0, 0, 1, 1], [], []>} : vector<12x128xbf16>, vector<128x256xbf16>, vector<12x256xf32> -> vector<12x256xf32>
    %c0_9 = arith.constant 0 : index
    %c0_10 = arith.constant 0 : index
    %15 = vector.load %arg5[%c0_9, %c0_10] : memref<1x256xf32, #tpu.memory_space<vmem>>, vector<1x256xf32>
    %16 = vector.broadcast %15 : vector<1x256xf32> to vector<12x256xf32>
    %17 = arith.addf %14, %16 : vector<12x256xf32>
    %18 = arith.negf %17 : vector<12x256xf32>
    %19 = math.exp %18 : vector<12x256xf32>
    %cst_11 = arith.constant 1.000000e+00 : f32
    %20 = vector.broadcast %cst_11 : f32 to vector<12x256xf32>
    %21 = arith.addf %20, %19 : vector<12x256xf32>
    %22 = arith.divf %20, %21 : vector<12x256xf32>
    %c0_12 = arith.constant 0 : index
    %c0_13 = arith.constant 0 : index
    %23 = vector.load %arg6[%c0_12, %c0_13] : memref<12x256xf32, #tpu.memory_space<vmem>>, vector<12x256xf32>
    tpu.vector_store %arg6[%c0_12, %c0_13], %22 {strides = array<i32>} : memref<12x256xf32, #tpu.memory_space<vmem>>, vector<12x256xf32>,
    return
  }
  func.func @transform_0(%arg0: i32) -> (i32, i32) {
    %c0_i32 = arith.constant 0 : i32
    %c0_i32_0 = arith.constant 0 : i32
    return %arg0, %c0_i32 : i32, i32
  }
  func.func @transform_1(%arg0: i32) -> (i32, i32) {
    %c0_i32 = arith.constant 0 : i32
    %c0_i32_0 = arith.constant 0 : i32
    %c0_i32_1 = arith.constant 0 : i32
    return %c0_i32, %c0_i32_0 : i32, i32
  }
  func.func @transform_2(%arg0: i32) -> (i32, i32) {
    %c0_i32 = arith.constant 0 : i32
    %c0_i32_0 = arith.constant 0 : i32
    %c0_i32_1 = arith.constant 0 : i32
    return %c0_i32, %c0_i32_0 : i32, i32
  }
  func.func @transform_3(%arg0: i32) -> (i32, i32) {
    %c0_i32 = arith.constant 0 : i32
    %c0_i32_0 = arith.constant 0 : i32
    %c0_i32_1 = arith.constant 0 : i32
    return %c0_i32, %c0_i32_0 : i32, i32
  }
  func.func @transform_4(%arg0: i32) -> (i32, i32) {
    %c0_i32 = arith.constant 0 : i32
    %c0_i32_0 = arith.constant 0 : i32
    %c0_i32_1 = arith.constant 0 : i32
    return %c0_i32, %c0_i32_0 : i32, i32
  }
  func.func @transform_5(%arg0: i32) -> (i32, i32) {
    %c0_i32 = arith.constant 0 : i32
    %c0_i32_0 = arith.constant 0 : i32
    return %arg0, %c0_i32 : i32, i32
  }
}

</mosaic_0001>

<llo_original>
// kernel: autoencoder_forward.1
$region0: #{autoencoder_forward.1}
  #allocation0 [shape = 'u32[]', space=smem, size = 0x4, offset = 0x4, fixed_abs, tag = 'smem constant byte address 0x4 - core index']
  #allocation1 [shape = 'u32[144,128]{1,0:T(1,128)}', space=vmem, size = 0x12000, scoped, tag = 'internal scratch']
  %s0 = inlined_call_operand.vmem [shape: f32[12,256], index: 0, kind: input, shape index: {}]
  %s1 = inlined_call_operand.vmem [shape: bf16[256,128], index: 1, kind: input, shape index: {}]
  %s2 = inlined_call_operand.vmem [shape: f32[1,128], index: 2, kind: input, shape index: {}]
  %s3 = inlined_call_operand.vmem [shape: bf16[128,256], index: 3, kind: input, shape index: {}]
  %s4 = inlined_call_operand.vmem [shape: f32[1,256], index: 4, kind: input, shape index: {}]
  %s5 = inlined_call_operand.hbm [shape: f32[12,256], index: 5, kind: output, shape index: {}]
  %s6 = sld [smem:[#allocation0]]
  $region30: #{autoencoder_forward.1} parent=0
    _
  %s8 = ssub.s32 1, %s6
  %s9 = scalar_select 0, %s8, %s6
  $region1: #{autoencoder_forward.1} parent=0
    #allocation2 [shape = 'u8[16384]{0}', space=vmem, size = 0x4000, scoped, tag = 'output window, operand 0, single buffered']
    #allocation3 [shape = 's32[1]{0}', space=sflag, size = 0x4, scoped, tag = 'scoped memory for autoencoder_forward.1']
    %10 = vsyncpa [#allocation3], 0
    // Predicated region
    $region2: #{autoencoder_forward.1} parent=1 // pred_check
      _
    $region3: #{autoencoder_forward.1} parent=1 // pred_check_branch
      %12 = sbr.rel (0) target = $region5
    $region4: #{autoencoder_forward.1} parent=1 // pred_region
      _
    $region5: #{autoencoder_forward.1} parent=1 // pred_fallthru
      _
    // Predicated region
    $region6: #{autoencoder_forward.1} parent=1 // pred_check
      _
    $region7: #{autoencoder_forward.1} parent=1 // pred_check_branch
      %14 = sbr.rel (0) target = $region9
    $region8: #{autoencoder_forward.1} parent=1 // pred_region
      _
    $region9: #{autoencoder_forward.1} parent=1 // pred_fallthru
      _
    // Predicated region
    $region10: #{autoencoder_forward.1} parent=1 // pred_check
      _
    $region11: #{autoencoder_forward.1} parent=1 // pred_check_branch
      %16 = sbr.rel (0) target = $region13
    $region12: #{autoencoder_forward.1} parent=1 // pred_region
      _
    $region13: #{autoencoder_forward.1} parent=1 // pred_fallthru
      _
    // Predicated region
    $region14: #{autoencoder_forward.1} parent=1 // pred_check
      _
    $region15: #{autoencoder_forward.1} parent=1 // pred_check_branch
      %18 = sbr.rel (0) target = $region17
    $region16: #{autoencoder_forward.1} parent=1 // pred_region
      _
    $region17: #{autoencoder_forward.1} parent=1 // pred_fallthru
      _
    // Predicated region
    $region18: #{autoencoder_forward.1} parent=1 // pred_check
      _
    $region19: #{autoencoder_forward.1} parent=1 // pred_check_branch
      %20 = sbr.rel (0) target = $region21
    $region20: #{autoencoder_forward.1} parent=1 // pred_region
      _
    $region21: #{autoencoder_forward.1} parent=1 // pred_fallthru
      _
    %v22 = vld [vmem:[%s0] sm:$0xff]
    %v23 = vld [vmem:[%s0 + $0x8] sm:$0xff]
    %v24 = vld [vmem:[%s0 + $0x10] sm:$0xf]
    %v25 = vld [vmem:[%s0 + $0x18] sm:$0xf]
    %v26 = vpack.c.bf16 %v24, %v22
    %v27 = vpack.c.bf16 %v25, %v23
    %v28 = vld [vmem:[%s1] sm:$0xf]
    %v29 = vld [vmem:[%s1 + $0x4] sm:$0xf]
    %v30 = vld [vmem:[%s1 + $0x8] sm:$0xf]
    %v31 = vld [vmem:[%s1 + $0xc] sm:$0xf]
    %v32 = vld [vmem:[%s1 + $0x10] sm:$0xf]
    %v33 = vld [vmem:[%s1 + $0x14] sm:$0xf]
    %v34 = vld [vmem:[%s1 + $0x18] sm:$0xf]
    %v35 = vld [vmem:[%s1 + $0x1c] sm:$0xf]
    %v36 = vld [vmem:[%s1 + $0x20] sm:$0xf]
    %v37 = vld [vmem:[%s1 + $0x24] sm:$0xf]
    %v38 = vld [vmem:[%s1 + $0x28] sm:$0xf]
    %v39 = vld [vmem:[%s1 + $0x2c] sm:$0xf]
    %v40 = vld [vmem:[%s1 + $0x30] sm:$0xf]
    %v41 = vld [vmem:[%s1 + $0x34] sm:$0xf]
    %v42 = vld [vmem:[%s1 + $0x38] sm:$0xf]
    %v43 = vld [vmem:[%s1 + $0x3c] sm:$0xf]
    %v44 = vld [vmem:[%s1 + $0x40] sm:$0xf]
    %v45 = vld [vmem:[%s1 + $0x44] sm:$0xf]
    %v46 = vld [vmem:[%s1 + $0x48] sm:$0xf]
    %v47 = vld [vmem:[%s1 + $0x4c] sm:$0xf]
    %v48 = vld [vmem:[%s1 + $0x50] sm:$0xf]
    %v49 = vld [vmem:[%s1 + $0x54] sm:$0xf]
    %v50 = vld [vmem:[%s1 + $0x58] sm:$0xf]
    %v51 = vld [vmem:[%s1 + $0x5c] sm:$0xf]
    %v52 = vld [vmem:[%s1 + $0x60] sm:$0xf]
    %v53 = vld [vmem:[%s1 + $0x64] sm:$0xf]
    %v54 = vld [vmem:[%s1 + $0x68] sm:$0xf]
    %v55 = vld [vmem:[%s1 + $0x6c] sm:$0xf]
    %v56 = vld [vmem:[%s1 + $0x70] sm:$0xf]
    %v57 = vld [vmem:[%s1 + $0x74] sm:$0xf]
    %v58 = vld [vmem:[%s1 + $0x78] sm:$0xf]
    %v59 = vld [vmem:[%s1 + $0x7c] sm:$0xf]
    %v60 = vld [vmem:[%s2] sm:$0x1]
    %v62 = vlaneseq
    %v63 = vshrl.u32 %v62, 7
    %v64 = vsub.s32 0, %v63
    %v65 = vrot.slane %v60, %v64
    %v99 = vunpack.c.l.b16 %v28
    %v100 = vunpack.c.l.b16 %v29
    %v101 = vunpack.c.l.b16 %v30
    %v102 = vunpack.c.l.b16 %v31
    %v103 = vunpack.c.l.b16 %v32
    %v104 = vunpack.c.l.b16 %v33
    %v105 = vunpack.c.l.b16 %v34
    %v106 = vunpack.c.l.b16 %v35
    %v107 = vunpack.c.l.b16 %v36
    %v108 = vunpack.c.l.b16 %v37
    %v109 = vunpack.c.l.b16 %v38
    %v110 = vunpack.c.l.b16 %v39
    %v111 = vunpack.c.l.b16 %v40
    %v112 = vunpack.c.l.b16 %v41
    %v113 = vunpack.c.l.b16 %v42
    %v114 = vunpack.c.l.b16 %v43
    %v115 = vunpack.c.l.b16 %v44
    %v116 = vunpack.c.l.b16 %v45
    %v117 = vunpack.c.l.b16 %v46
    %v118 = vunpack.c.l.b16 %v47
    %v119 = vunpack.c.l.b16 %v48
    %v120 = vunpack.c.l.b16 %v49
    %v121 = vunpack.c.l.b16 %v50
    %v122 = vunpack.c.l.b16 %v51
    %v123 = vunpack.c.l.b16 %v52
    %v124 = vunpack.c.l.b16 %v53
    %v125 = vunpack.c.l.b16 %v54
    %v126 = vunpack.c.l.b16 %v55
    %v127 = vunpack.c.l.b16 %v56
    %v128 = vunpack.c.l.b16 %v57
    %v129 = vunpack.c.l.b16 %v58
    %v130 = vunpack.c.l.b16 %v59
    %v131 = vpack.c.b16 %v100, %v99
    %v132 = vpack.c.b16 %v102, %v101
    %v133 = vpack.c.b16 %v104, %v103
    %v134 = vpack.c.b16 %v106, %v105
    %v135 = vpack.c.b16 %v108, %v107
    %v136 = vpack.c.b16 %v110, %v109
    %v137 = vpack.c.b16 %v112, %v111
    %v138 = vpack.c.b16 %v114, %v113
    %v139 = vpack.c.b16 %v116, %v115
    %v140 = vpack.c.b16 %v118, %v117
    %v141 = vpack.c.b16 %v120, %v119
    %v142 = vpack.c.b16 %v122, %v121
    %v143 = vpack.c.b16 %v124, %v123
    %v144 = vpack.c.b16 %v126, %v125
    %v145 = vpack.c.b16 %v128, %v127
    %v146 = vpack.c.b16 %v130, %v129
    %163 = vmatprep.subr.bf16.mxu0 0
    %164 = vmatpush1.bf16.msra.mxu0 %v138
    %165 = vmatprep.subr.bf16.mxu0 0
    %166 = vmatpush1.bf16.msra.mxu0 %v137
    %167 = vmatprep.subr.bf16.mxu0 0
    %168 = vmatpush1.bf16.msra.mxu0 %v136
    %169 = vmatprep.subr.bf16.mxu0 0
    %170 = vmatpush1.bf16.msra.mxu0 %v135
    %171 = vmatprep.subr.bf16.mxu0 0
    %172 = vmatpush1.bf16.msra.mxu0 %v134
    %173 = vmatprep.subr.bf16.mxu0 0
    %174 = vmatpush1.bf16.msra.mxu0 %v133
    %175 = vmatprep.subr.bf16.mxu0 0
    %176 = vmatpush1.bf16.msra.mxu0 %v132
    %177 = vmatprep.subr.bf16.mxu0 0
    %178 = vmatpush1.bf16.msra.mxu0 %v131
    %179 = vmatprep.subr.bf16.mxu0 0
    %180 = vmatpush2.bf16.msra.mxu0 %v146
    %181 = vmatprep.subr.bf16.mxu0 0
    %182 = vmatpush2.bf16.msra.mxu0 %v145
    %183 = vmatprep.subr.bf16.mxu0 0
    %184 = vmatpush2.bf16.msra.mxu0 %v144
    %185 = vmatprep.subr.bf16.mxu0 0
    %186 = vmatpush2.bf16.msra.mxu0 %v143
    %187 = vmatprep.subr.bf16.mxu0 0
    %188 = vmatpush2.bf16.msra.mxu0 %v142
    %189 = vmatprep.subr.bf16.mxu0 0
    %190 = vmatpush2.bf16.msra.mxu0 %v141
    %191 = vmatprep.subr.bf16.mxu0 0
    %192 = vmatpush2.bf16.msra.mxu0 %v140
    %193 = vmatprep.subr.bf16.mxu0 0
    %194 = vmatpush2.bf16.msra.mxu0 %v139
    %195 = vmatprep.mubr.bf16.mxu0 %v27
    %196 = vmatmul.mubr.bf16.gmra.mxu0 %v26
    %v197 = vpop.f32.mrf.mxu0
    %v198 = vadd.f32 %v65, %v197
    %v199 = vpop.f32.mrf.mxu0
    %v200 = vpop.f32.mrf.mxu0
    %v201 = vadd.f32 %v65, %v200
    %v202 = vpop.f32.mrf.mxu0
    %203 = vdwg.mxu0
    %v204 = vxor.u32 %v198, 2147483648
    %v205 = vxor.u32 %v201, 2147483648
    %v206 = vmul.f32 %v204, 1.442695
    %v207 = vpow.pop %v206
    %v208 = vmul.f32 %v205, 1.442695
    %v209 = vpow.pop %v208
    %v210 = vadd.f32 %v207, 1.0
    %v211 = vadd.f32 %v209, 1.0
    %v212 = vrcp.pop %v210
    %v213 = vmul.f32 1.0, %v212
    %v214 = vrcp.pop %v211
    %v215 = vmul.f32 1.0, %v214
    %v216 = vpack.c.bf16 %v215, %v213
    %v217 = vld [vmem:[%s3] sm:$0xff]
    %v218 = vld [vmem:[%s3 + $0x8] sm:$0xff]
    %v219 = vld [vmem:[%s3 + $0x10] sm:$0xff]
    %v220 = vld [vmem:[%s3 + $0x18] sm:$0xff]
    %v221 = vld [vmem:[%s3 + $0x20] sm:$0xff]
    %v222 = vld [vmem:[%s3 + $0x28] sm:$0xff]
    %v223 = vld [vmem:[%s3 + $0x30] sm:$0xff]
    %v224 = vld [vmem:[%s3 + $0x38] sm:$0xff]
    %v225 = vld [vmem:[%s3 + $0x40] sm:$0xff]
    %v226 = vld [vmem:[%s3 + $0x48] sm:$0xff]
    %v227 = vld [vmem:[%s3 + $0x50] sm:$0xff]
    %v228 = vld [vmem:[%s3 + $0x58] sm:$0xff]
    %v229 = vld [vmem:[%s3 + $0x60] sm:$0xff]
    %v230 = vld [vmem:[%s3 + $0x68] sm:$0xff]
    %v231 = vld [vmem:[%s3 + $0x70] sm:$0xff]
    %v232 = vld [vmem:[%s3 + $0x78] sm:$0xff]
    %v233 = vld [vmem:[%s4] sm:$0x3]
    %v235 = vlaneseq
    %v236 = vshrl.u32 %v235, 7
    %v237 = vsub.s32 0, %v236
    %v238 = vrot.slane %v233, %v237
    %v239 = vlaneseq
    %v240 = vshrl.u32 %v239, 7
    %v241 = vsub.s32 1, %v240
    %v242 = vrot.slane %v233, %v241
    %v261 = vunpack.c.l.b16 %v217
    %v262 = vunpack.c.h.b16 %v217
    %v263 = vunpack.c.l.b16 %v218
    %v264 = vunpack.c.h.b16 %v218
    %v265 = vunpack.c.l.b16 %v219
    %v266 = vunpack.c.h.b16 %v219
    %v267 = vunpack.c.l.b16 %v220
    %v268 = vunpack.c.h.b16 %v220
    %v269 = vunpack.c.l.b16 %v221
    %v270 = vunpack.c.h.b16 %v221
    %v271 = vunpack.c.l.b16 %v222
    %v272 = vunpack.c.h.b16 %v222
    %v273 = vunpack.c.l.b16 %v223
    %v274 = vunpack.c.h.b16 %v223
    %v275 = vunpack.c.l.b16 %v224
    %v276 = vunpack.c.h.b16 %v224
    %v277 = vunpack.c.l.b16 %v225
    %v278 = vunpack.c.h.b16 %v225
    %v279 = vunpack.c.l.b16 %v226
    %v280 = vunpack.c.h.b16 %v226
    %v281 = vunpack.c.l.b16 %v227
    %v282 = vunpack.c.h.b16 %v227
    %v283 = vunpack.c.l.b16 %v228
    %v284 = vunpack.c.h.b16 %v228
    %v285 = vunpack.c.l.b16 %v229
    %v286 = vunpack.c.h.b16 %v229
    %v287 = vunpack.c.l.b16 %v230
    %v288 = vunpack.c.h.b16 %v230
    %v289 = vunpack.c.l.b16 %v231
    %v290 = vunpack.c.h.b16 %v231
    %v291 = vunpack.c.l.b16 %v232
    %v292 = vunpack.c.h.b16 %v232
    %v293 = vpack.c.b16 %v263, %v261
    %v294 = vpack.c.b16 %v264, %v262
    %v295 = vpack.c.b16 %v267, %v265
    %v296 = vpack.c.b16 %v268, %v266
    %v297 = vpack.c.b16 %v271, %v269
    %v298 = vpack.c.b16 %v272, %v270
    %v299 = vpack.c.b16 %v275, %v273
    %v300 = vpack.c.b16 %v276, %v274
    %v301 = vpack.c.b16 %v279, %v277
    %v302 = vpack.c.b16 %v280, %v278
    %v303 = vpack.c.b16 %v283, %v281
    %v304 = vpack.c.b16 %v284, %v282
    %v305 = vpack.c.b16 %v287, %v285
    %v306 = vpack.c.b16 %v288, %v286
    %v307 = vpack.c.b16 %v291, %v289
    %v308 = vpack.c.b16 %v292, %v290
    %325 = vmatprep.subr.bf16.mxu0 %v308
    %326 = vmatpush1.bf16.msra.mxu0 %v307
    %327 = vmatprep.subr.bf16.mxu0 %v306
    %328 = vmatpush1.bf16.msra.mxu0 %v305
    %329 = vmatprep.subr.bf16.mxu0 %v304
    %330 = vmatpush1.bf16.msra.mxu0 %v303
    %331 = vmatprep.subr.bf16.mxu0 %v302
    %332 = vmatpush1.bf16.msra.mxu0 %v301
    %333 = vmatprep.subr.bf16.mxu0 %v300
    %334 = vmatpush1.bf16.msra.mxu0 %v299
    %335 = vmatprep.subr.bf16.mxu0 %v298
    %336 = vmatpush1.bf16.msra.mxu0 %v297
    %337 = vmatprep.subr.bf16.mxu0 %v296
    %338 = vmatpush1.bf16.msra.mxu0 %v295
    %339 = vmatprep.subr.bf16.mxu0 %v294
    %340 = vmatpush1.bf16.msra.mxu0 %v293
    %341 = vmatprep.subr.bf16.mxu0 0
    %342 = vmatpush2.bf16.msra.mxu0 0
    %343 = vmatprep.subr.bf16.mxu0 0
    %344 = vmatpush2.bf16.msra.mxu0 0
    %345 = vmatprep.subr.bf16.mxu0 0
    %346 = vmatpush2.bf16.msra.mxu0 0
    %347 = vmatprep.subr.bf16.mxu0 0
    %348 = vmatpush2.bf16.msra.mxu0 0
    %349 = vmatprep.subr.bf16.mxu0 0
    %350 = vmatpush2.bf16.msra.mxu0 0
    %351 = vmatprep.subr.bf16.mxu0 0
    %352 = vmatpush2.bf16.msra.mxu0 0
    %353 = vmatprep.subr.bf16.mxu0 0
    %354 = vmatpush2.bf16.msra.mxu0 0
    %355 = vmatprep.subr.bf16.mxu0 0
    %356 = vmatpush2.bf16.msra.mxu0 0
    %357 = vmatprep.mubr.bf16.mxu0 0
    %358 = vmatmul.mubr.bf16.gmra.mxu0 %v216
    %v359 = vpop.f32.mrf.mxu0
    %v360 = vadd.f32 %v238, %v359
    %v361 = vpop.f32.mrf.mxu0
    %v362 = vadd.f32 %v242, %v361
    %v363 = vpop.f32.mrf.mxu0
    %v364 = vadd.f32 %v238, %v363
    %v365 = vpop.f32.mrf.mxu0
    %v366 = vadd.f32 %v242, %v365
    %367 = vdwg.mxu0
    %v368 = vxor.u32 %v360, 2147483648
    %v369 = vxor.u32 %v362, 2147483648
    %v370 = vxor.u32 %v364, 2147483648
    %v371 = vxor.u32 %v366, 2147483648
    %v372 = vmul.f32 %v368, 1.442695
    %v373 = vpow.pop %v372
    %v374 = vmul.f32 %v369, 1.442695
    %v375 = vpow.pop %v374
    %v376 = vmul.f32 %v370, 1.442695
    %v377 = vpow.pop %v376
    %v378 = vmul.f32 %v371, 1.442695
    %v379 = vpow.pop %v378
    %v380 = vadd.f32 %v373, 1.0
    %v381 = vadd.f32 %v375, 1.0
    %v382 = vadd.f32 %v377, 1.0
    %v383 = vadd.f32 %v379, 1.0
    %v384 = vrcp.pop %v380
    %v385 = vmul.f32 1.0, %v384
    %v386 = vrcp.pop %v381
    %v387 = vmul.f32 1.0, %v386
    %v388 = vrcp.pop %v382
    %v389 = vmul.f32 1.0, %v388
    %v390 = vrcp.pop %v383
    %v391 = vmul.f32 1.0, %v390
    %392 = vst [vmem:[#allocation2] sm:$0xff] %v385
    %393 = vst [vmem:[#allocation2 + $0x8] sm:$0xff] %v387
    %394 = vst [vmem:[#allocation2 + $0x10] sm:$0xf] %v389
    %395 = vst [vmem:[#allocation2 + $0x18] sm:$0xf] %v391
    // Predicated region
    $region22: #{autoencoder_forward.1} parent=1 // pred_check
      _
    $region23: #{autoencoder_forward.1} parent=1 // pred_check_branch
      %397 = sbr.rel (0) target = $region25
    $region24: #{autoencoder_forward.1} parent=1 // pred_region
      %s399 = ssub.s32 512, 512
      %400 = vsyncadd [#allocation3], %s399
      %s401 = sshll.u32 [#allocation2], 4
      %s402 = int_to_ptr.vmem [resolvable:$true] %s401
      %407 = dma.vmem_to_hbm [thread:$0]  %s402, 512, %s5, [#allocation3], 256, 256, 16
    $region25: #{autoencoder_forward.1} parent=1 // pred_fallthru
      _
    // Predicated region
    $region26: #{autoencoder_forward.1} parent=1 // pred_check
      _
    $region27: #{autoencoder_forward.1} parent=1 // pred_check_branch
      %409 = sbr.rel (0) target = $region29
    $region28: #{autoencoder_forward.1} parent=1 // pred_region
      %410 = dma.done [#allocation3], 512
    $region29: #{autoencoder_forward.1} parent=1 // pred_fallthru
      _
    %411 = vsyncpa [#allocation3], 1

</llo_original>
